<compile_context>
chip_gen: v5e
topology: v5e:2x2
jax: 0.10.0
libtpu: 0.0.40
codegen_flags: <defaults>
</compile_context>

<pallas_src>
import functools
from typing import NamedTuple, Tuple

import jax
import jax.numpy as jnp
from jax.experimental import pallas as pl
from jax.experimental.pallas import tpu as pltpu

_LANES = 128
_MAX_TILE_ROWS = 2048                 # 2048 x 128 x 4 B = 1 MiB per f32 array per grid step
_VMEM_LIMIT_BYTES = 32 * 1024 * 1024  # safe on v5e (128 MiB phys) / v6e (128) / v7x (64)


class _ALIFConfig(NamedTuple):
    shape: Tuple[int, ...]
    alpha_mem: float
    alpha_adapt: float
    threshold: float
    reset_potential: float
    adaptation_strength: float
    refractory_period: int
    max_tile_rows: int


def _alif_kernel(i_ref, v_ref, a_ref, r_ref, s_out, v_out, a_out, r_out, *,
                 alpha_mem, alpha_adapt, threshold, reset_potential,
                 adaptation_strength, refractory_period):
    """Single-step adaptive LIF update; pure elementwise (HBM-bandwidth bound)."""
    # refractory_counter = clamp(refractory_counter - 1, 0)  (int8 in HBM, i32 in-register)
    r = jnp.maximum(r_ref[...].astype(jnp.int32) - 1, 0)
    non_refractory = (r == 0).astype(jnp.float32)

    # membrane = (alpha_mem * V + I - A) * non_refractory
    v = (jnp.float32(alpha_mem) * v_ref[...] + i_ref[...] - a_ref[...]) * non_refractory

    # spikes = (V >= threshold).float()
    spk = v >= jnp.float32(threshold)
    spikes = spk.astype(jnp.float32)

    # V = where(spike, reset_potential, V)
    v = jnp.where(spk, jnp.float32(reset_potential), v)

    # A = alpha_adapt * A + adaptation_strength * spikes
    a = jnp.float32(alpha_adapt) * a_ref[...] + jnp.float32(adaptation_strength) * spikes

    # refractory = where(spike, refractory_period, refractory)
    r_new = jnp.where(spk, jnp.int32(refractory_period), r)

    s_out[...] = spikes
    v_out[...] = v
    a_out[...] = a
    r_out[...] = r_new.astype(jnp.int8)


def _pack(x, lead, n, rows, width, dtype):
    """Reshape/pad `x` into a lane-dense (lead, rows, width) slab (zero padded)."""
    flat = x.reshape(lead, n)
    if flat.dtype != dtype:
        flat = flat.astype(dtype)
    pad = rows * width - n
    if pad:
        flat = jnp.pad(flat, ((0, 0), (0, pad)))
    return flat.reshape(lead, rows, width)


def _unpack(slab, n, out_shape):
    lead = slab.shape[0]
    return slab.reshape(lead, -1)[:, :n].reshape(out_shape)


def _alif_step(input_current, v_state, a_state, r_state, *, cfg: _ALIFConfig):
    neuron_shape = cfg.shape
    nd = len(neuron_shape)
    out_shape = input_current.shape

    n = 1
    for d in neuron_shape:
        n *= int(d)
    b = 1
    for d in out_shape[:len(out_shape) - nd]:
        b *= int(d)

    width = _LANES
    rows = -(-n // width)                       # ceil(n / 128)
    tr = min(cfg.max_tile_rows, rows)           # full dim if small, else 32-aligned tile
    num_tiles = -(-rows // tr)
    pad = rows * width - n

    i_s = _pack(input_current, b, n, rows, width, jnp.float32)

    def pack_state(state, dtype):
        if state.shape == out_shape:            # already batched from a previous step
            return _pack(state, b, n, rows, width, dtype), True
        if state.shape == neuron_shape:         # unbatched persistent state
            return _pack(state, 1, n, rows, width, dtype), False
        # Rare fallback: any other broadcast-compatible state shape.
        return _pack(jnp.broadcast_to(state, out_shape), b, n, rows, width, dtype), True

    v_s, v_batched = pack_state(v_state, jnp.float32)
    a_s, a_batched = pack_state(a_state, jnp.float32)
    r_s, r_batched = pack_state(r_state, jnp.int8)

    blk = (1, tr, width)
    batched_spec = pl.BlockSpec(blk, lambda bi, ti: (bi, ti, 0))
    shared_spec = pl.BlockSpec(blk, lambda bi, ti: (0, ti, 0))   # same state block for every b

    in_specs = [batched_spec,
                batched_spec if v_batched else shared_spec,
                batched_spec if a_batched else shared_spec,
                batched_spec if r_batched else shared_spec]
    out_specs = (batched_spec, batched_spec, batched_spec, batched_spec)

    slab_f32 = jax.ShapeDtypeStruct((b, rows, width), jnp.float32)
    slab_i8 = jax.ShapeDtypeStruct((b, rows, width), jnp.int8)
    out_shapes = (slab_f32, slab_f32, slab_f32, slab_i8)

    # Alias inputs to outputs only when the operands are fresh padded temporaries; aliasing a
    # raw jit parameter would force XLA to insert a defensive copy (extra HBM traffic).
    out_slab = (b, rows, width)
    aliases = {}
    if pad:
        for idx, slab in enumerate((i_s, v_s, a_s, r_s)):
            if slab.shape == out_slab:
                aliases[idx] = idx

    elems = b * rows * width
    kernel = functools.partial(
        _alif_kernel,
        alpha_mem=cfg.alpha_mem, alpha_adapt=cfg.alpha_adapt,
        threshold=cfg.threshold, reset_potential=cfg.reset_potential,
        adaptation_strength=cfg.adaptation_strength,
        refractory_period=cfg.refractory_period)

    spikes_s, v_new_s, a_new_s, r_new_s = pl.pallas_call(
        kernel,
        out_shape=out_shapes,
        grid=(b, num_tiles),
        in_specs=in_specs,
        out_specs=out_specs,
        input_output_aliases=aliases,
        compiler_params=pltpu.CompilerParams(
            dimension_semantics=("parallel", "parallel"),
            vmem_limit_bytes=_VMEM_LIMIT_BYTES),
        cost_estimate=pl.CostEstimate(
            flops=12 * elems, transcendentals=0, bytes_accessed=26 * elems),
    )(i_s, v_s, a_s, r_s)

    spikes = _unpack(spikes_s, n, out_shape)
    v_new = _unpack(v_new_s, n, out_shape)
    a_new = _unpack(a_new_s, n, out_shape)
    r_new = _unpack(r_new_s, n, out_shape)
    return spikes, v_new, a_new, r_new


_alif_step_jit = jax.jit(_alif_step, static_argnames=("cfg",))


class AdaptiveLeakyIntegrateAndFire:
    """JAX/Pallas adaptive LIF neuron (concrete BaseSpikingNeuron forward)."""

    def __init__(self, shape, tau_mem=20.0, tau_adapt=200.0, threshold=1.0,
                 reset_potential=0.0, adaptation_strength=0.1,
                 refractory_period=2, dt=1.0, max_tile_rows=_MAX_TILE_ROWS):
        if isinstance(shape, int):
            shape = (shape,)
        self.shape = tuple(int(s) for s in shape)
        self.dt = float(dt)
        self.tau_mem = float(tau_mem)
        self.tau_adapt = float(tau_adapt)
        self.threshold = float(threshold)
        self.reset_potential = float(reset_potential)
        self.adaptation_strength = float(adaptation_strength)
        self.refractory_period = int(refractory_period)
        if not 0 <= self.refractory_period <= 127:
            raise ValueError("refractory_period must fit in int8 state")
        if max_tile_rows % 32 != 0:
            raise ValueError("max_tile_rows must be a multiple of 32 (int8 sublane packing)")
        self.max_tile_rows = int(max_tile_rows)

        self.alpha_mem = float(jnp.exp(jnp.float32(-self.dt / self.tau_mem)))
        self.alpha_adapt = float(jnp.exp(jnp.float32(-self.dt / self.tau_adapt)))

        self._cfg = _ALIFConfig(
            shape=self.shape, alpha_mem=self.alpha_mem, alpha_adapt=self.alpha_adapt,
            threshold=self.threshold, reset_potential=self.reset_potential,
            adaptation_strength=self.adaptation_strength,
            refractory_period=self.refractory_period, max_tile_rows=self.max_tile_rows)

        # Persistent buffers (deterministic zero init, as in the PyTorch module).
        self.membrane_potential = jnp.zeros(self.shape, jnp.float32)
        self.spike_history = jnp.zeros(self.shape, jnp.float32)
        self.adaptation_current = jnp.zeros(self.shape, jnp.float32)
        self.refractory_counter = jnp.zeros(self.shape, jnp.int8)

    def forward(self, input_current):
        nd = len(self.shape)
        if tuple(input_current.shape[-nd:]) != self.shape:
            raise ValueError(
                f"input_current shape {input_current.shape} does not end with the neuron "
                f"shape {self.shape} (leading batch dimensions are allowed)")
        spikes, v, a, r = _alif_step_jit(
            input_current, self.membrane_potential, self.adaptation_current,
            self.refractory_counter, cfg=self._cfg)
        self.membrane_potential = v
        self.adaptation_current = a
        self.refractory_counter = r
        self.spike_history = spikes
        return spikes

    __call__ = forward

    def reset_state(self):
        self.membrane_potential = jnp.zeros(self.shape, jnp.float32)
        self.spike_history = jnp.zeros(self.shape, jnp.float32)
        self.adaptation_current = jnp.zeros(self.shape, jnp.float32)
        self.refractory_counter = jnp.zeros(self.shape, jnp.int8)

    def get_state(self):
        return {
            "membrane_potential": self.membrane_potential,
            "spike_history": self.spike_history,
            "adaptation_current": self.adaptation_current,
            "refractory_counter": self.refractory_counter,
        }


def _reference_forward(cfg, input_current, v, a, r):
    """Pure-JAX reference mirroring the PyTorch ALIF forward."""
    r = jnp.maximum(r - 1, 0)
    non_ref = (r == 0).astype(jnp.float32)
    v = (jnp.float32(cfg.alpha_mem) * v + input_current - a) * non_ref
    spikes = (v >= jnp.float32(cfg.threshold)).astype(jnp.float32)
    spk = spikes > 0
    v = jnp.where(spk, jnp.float32(cfg.reset_potential), v)
    a = jnp.float32(cfg.alpha_adapt) * a + jnp.float32(cfg.adaptation_strength) * spikes
    r = jnp.where(spk, cfg.refractory_period, r)
    return spikes, v, a, r


def _run_case(neuron, inputs):
    """Step the Pallas neuron and the pure-JAX reference together; assert they match."""
    cfg = neuron._cfg
    v = jnp.zeros(neuron.shape, jnp.float32)
    a = jnp.zeros(neuron.shape, jnp.float32)
    r = jnp.zeros(neuron.shape, jnp.int32)
    for x in inputs:
        spikes = neuron.forward(x)
        jax.block_until_ready(spikes)
        jax.block_until_ready(neuron.membrane_potential)
        s_ref, v, a, r = _reference_forward(cfg, x, v, a, r)
        assert spikes.shape == x.shape and spikes.dtype == jnp.float32
        assert jnp.allclose(spikes, s_ref)
        assert jnp.allclose(neuron.membrane_potential, v, atol=1e-5)
        assert jnp.allclose(neuron.adaptation_current, a, atol=1e-5)
        assert jnp.array_equal(neuron.refractory_counter.astype(jnp.int32), r)


if __name__ == "__main__":
    key = jax.random.PRNGKey(0)
    k1, k2, k3, k4 = jax.random.split(key, 4)

    # Case 1: small NCHW population, two timesteps.
    #   step 1 exercises the unbatched shared-state index_map path;
    #   step 2 exercises batched state and active refractory periods.
    batch, C, H, W = 2, 4, 16, 16
    neuron1 = AdaptiveLeakyIntegrateAndFire((C, H, W))
    x1 = 1.5 * jax.random.normal(k1, (batch, C, H, W), jnp.float32)
    x2 = 1.5 * jax.random.normal(k2, (batch, C, H, W), jnp.float32)
    _run_case(neuron1, [x1, x2])

    # Case 2: lane padding + multi-row-tile grid (small max_tile_rows so the row axis is
    # actually tiled) + input/output aliasing on the padded, batched second step.
    neuron2 = AdaptiveLeakyIntegrateAndFire((100, 409), max_tile_rows=64)
    y1 = 1.5 * jax.random.normal(k3, (2, 100, 409), jnp.float32)
    y2 = 1.5 * jax.random.normal(k4, (2, 100, 409), jnp.float32)
    _run_case(neuron2, [y1, y2])

    print("KERNEL_OK")
</pallas_src>

<mosaic_0001>
module attributes {stable_mosaic.version = 11 : i64} {
  func.func @_alif_kernel(%arg0: i32, %arg1: i32, %arg2: memref<1x8x128xf32, #tpu.memory_space<vmem>>, %arg3: memref<1x8x128xf32, #tpu.memory_space<vmem>>, %arg4: memref<1x8x128xf32, #tpu.memory_space<vmem>>, %arg5: memref<1x8x128xi8, #tpu.memory_space<vmem>>, %arg6: memref<1x8x128xf32, #tpu.memory_space<vmem>>, %arg7: memref<1x8x128xf32, #tpu.memory_space<vmem>>, %arg8: memref<1x8x128xf32, #tpu.memory_space<vmem>>, %arg9: memref<1x8x128xi8, #tpu.memory_space<vmem>>) attributes {dimension_semantics = [#tpu.dimension_semantics<parallel>, #tpu.dimension_semantics<parallel>], iteration_bounds = array<i64: 2, 1>, scalar_prefetch = 0 : i64, scratch_operands = 0 : i64, tpu.core_type = #tpu.core_type<tc>, window_params = [{transform_indices = @transform_0, window_bounds = array<i64: 1, 8, 128>}, {transform_indices = @transform_1, window_bounds = array<i64: 1, 8, 128>}, {transform_indices = @transform_2, window_bounds = array<i64: 1, 8, 128>}, {transform_indices = @transform_3, window_bounds = array<i64: 1, 8, 128>}, {transform_indices = @transform_4, window_bounds = array<i64: 1, 8, 128>}, {transform_indices = @transform_5, window_bounds = array<i64: 1, 8, 128>}, {transform_indices = @transform_6, window_bounds = array<i64: 1, 8, 128>}, {transform_indices = @transform_7, window_bounds = array<i64: 1, 8, 128>}]} {
    %c0 = arith.constant 0 : index
    %c0_0 = arith.constant 0 : index
    %c0_1 = arith.constant 0 : index
    %0 = vector.load %arg5[%c0, %c0_0, %c0_1] : memref<1x8x128xi8, #tpu.memory_space<vmem>>, vector<1x8x128xi8>
    %1 = arith.extsi %0 : vector<1x8x128xi8> to vector<1x8x128xi32>
    %c1_i32 = arith.constant 1 : i32
    %2 = vector.broadcast %c1_i32 : i32 to vector<1x8x128xi32>
    %3 = arith.subi %1, %2 : vector<1x8x128xi32>
    %c0_i32 = arith.constant 0 : i32
    %4 = vector.broadcast %c0_i32 : i32 to vector<1x8x128xi32>
    %5 = arith.maxsi %3, %4 : vector<1x8x128xi32>
    %c0_i32_2 = arith.constant 0 : i32
    %6 = vector.broadcast %c0_i32_2 : i32 to vector<1x8x128xi32>
    %7 = arith.cmpi eq, %5, %6 : vector<1x8x128xi32>
    %8 = arith.extui %7 : vector<1x8x128xi1> to vector<1x8x128xi32>
    %9 = arith.sitofp %8 : vector<1x8x128xi32> to vector<1x8x128xf32>
    %c0_3 = arith.constant 0 : index
    %c0_4 = arith.constant 0 : index
    %c0_5 = arith.constant 0 : index
    %10 = vector.load %arg3[%c0_3, %c0_4, %c0_5] : memref<1x8x128xf32, #tpu.memory_space<vmem>>, vector<1x8x128xf32>
    %cst = arith.constant 0.951229453 : f32
    %11 = vector.broadcast %cst : f32 to vector<1x8x128xf32>
    %12 = arith.mulf %11, %10 : vector<1x8x128xf32>
    %c0_6 = arith.constant 0 : index
    %c0_7 = arith.constant 0 : index
    %c0_8 = arith.constant 0 : index
    %13 = vector.load %arg2[%c0_6, %c0_7, %c0_8] : memref<1x8x128xf32, #tpu.memory_space<vmem>>, vector<1x8x128xf32>
    %14 = arith.addf %12, %13 : vector<1x8x128xf32>
    %c0_9 = arith.constant 0 : index
    %c0_10 = arith.constant 0 : index
    %c0_11 = arith.constant 0 : index
    %15 = vector.load %arg4[%c0_9, %c0_10, %c0_11] : memref<1x8x128xf32, #tpu.memory_space<vmem>>, vector<1x8x128xf32>
    %16 = arith.subf %14, %15 : vector<1x8x128xf32>
    %17 = arith.mulf %16, %9 : vector<1x8x128xf32>
    %cst_12 = arith.constant 1.000000e+00 : f32
    %18 = vector.broadcast %cst_12 : f32 to vector<1x8x128xf32>
    %19 = arith.cmpf oge, %17, %18 : vector<1x8x128xf32>
    %20 = arith.extui %19 : vector<1x8x128xi1> to vector<1x8x128xi32>
    %21 = arith.sitofp %20 : vector<1x8x128xi32> to vector<1x8x128xf32>
    %cst_13 = arith.constant 0.000000e+00 : f32
    %22 = vector.broadcast %cst_13 : f32 to vector<1x8x128xf32>
    %23 = arith.select %19, %22, %17 : vector<1x8x128xi1>, vector<1x8x128xf32>
    %c0_14 = arith.constant 0 : index
    %c0_15 = arith.constant 0 : index
    %c0_16 = arith.constant 0 : index
    %24 = vector.load %arg4[%c0_14, %c0_15, %c0_16] : memref<1x8x128xf32, #tpu.memory_space<vmem>>, vector<1x8x128xf32>
    %cst_17 = arith.constant 0.995012462 : f32
    %25 = vector.broadcast %cst_17 : f32 to vector<1x8x128xf32>
    %26 = arith.mulf %25, %24 : vector<1x8x128xf32>
    %cst_18 = arith.constant 1.000000e-01 : f32
    %27 = vector.broadcast %cst_18 : f32 to vector<1x8x128xf32>
    %28 = arith.mulf %27, %21 : vector<1x8x128xf32>
    %29 = arith.addf %26, %28 : vector<1x8x128xf32>
    %c2_i32 = arith.constant 2 : i32
    %30 = vector.broadcast %c2_i32 : i32 to vector<1x8x128xi32>
    %31 = arith.select %19, %30, %5 : vector<1x8x128xi1>, vector<1x8x128xi32>
    %c0_19 = arith.constant 0 : index
    %c0_20 = arith.constant 0 : index
    %c0_21 = arith.constant 0 : index
    %32 = vector.load %arg6[%c0_19, %c0_20, %c0_21] : memref<1x8x128xf32, #tpu.memory_space<vmem>>, vector<1x8x128xf32>
    tpu.vector_store %arg6[%c0_19, %c0_20, %c0_21], %21 {strides = array<i32>} : memref<1x8x128xf32, #tpu.memory_space<vmem>>, vector<1x8x128xf32>,
    %c0_22 = arith.constant 0 : index
    %c0_23 = arith.constant 0 : index
    %c0_24 = arith.constant 0 : index
    %33 = vector.load %arg7[%c0_22, %c0_23, %c0_24] : memref<1x8x128xf32, #tpu.memory_space<vmem>>, vector<1x8x128xf32>
    tpu.vector_store %arg7[%c0_22, %c0_23, %c0_24], %23 {strides = array<i32>} : memref<1x8x128xf32, #tpu.memory_space<vmem>>, vector<1x8x128xf32>,
    %c0_25 = arith.constant 0 : index
    %c0_26 = arith.constant 0 : index
    %c0_27 = arith.constant 0 : index
    %34 = vector.load %arg8[%c0_25, %c0_26, %c0_27] : memref<1x8x128xf32, #tpu.memory_space<vmem>>, vector<1x8x128xf32>
    tpu.vector_store %arg8[%c0_25, %c0_26, %c0_27], %29 {strides = array<i32>} : memref<1x8x128xf32, #tpu.memory_space<vmem>>, vector<1x8x128xf32>,
    %35 = arith.trunci %31 : vector<1x8x128xi32> to vector<1x8x128xi8>
    %c0_28 = arith.constant 0 : index
    %c0_29 = arith.constant 0 : index
    %c0_30 = arith.constant 0 : index
    %36 = vector.load %arg9[%c0_28, %c0_29, %c0_30] : memref<1x8x128xi8, #tpu.memory_space<vmem>>, vector<1x8x128xi8>
    tpu.vector_store %arg9[%c0_28, %c0_29, %c0_30], %35 {strides = array<i32>} : memref<1x8x128xi8, #tpu.memory_space<vmem>>, vector<1x8x128xi8>,
    return
  }
  func.func @transform_0(%arg0: i32, %arg1: i32) -> (i32, i32, i32) {
    %c0_i32 = arith.constant 0 : i32
    %c0_i32_0 = arith.constant 0 : i32
    return %arg0, %arg1, %c0_i32 : i32, i32, i32
  }
  func.func @transform_1(%arg0: i32, %arg1: i32) -> (i32, i32, i32) {
    %c0_i32 = arith.constant 0 : i32
    %c0_i32_0 = arith.constant 0 : i32
    %c0_i32_1 = arith.constant 0 : i32
    return %c0_i32, %arg1, %c0_i32_0 : i32, i32, i32
  }
  func.func @transform_2(%arg0: i32, %arg1: i32) -> (i32, i32, i32) {
    %c0_i32 = arith.constant 0 : i32
    %c0_i32_0 = arith.constant 0 : i32
    %c0_i32_1 = arith.constant 0 : i32
    return %c0_i32, %arg1, %c0_i32_0 : i32, i32, i32
  }
  func.func @transform_3(%arg0: i32, %arg1: i32) -> (i32, i32, i32) {
    %c0_i32 = arith.constant 0 : i32
    %c0_i32_0 = arith.constant 0 : i32
    %c0_i32_1 = arith.constant 0 : i32
    return %c0_i32, %arg1, %c0_i32_0 : i32, i32, i32
  }
  func.func @transform_4(%arg0: i32, %arg1: i32) -> (i32, i32, i32) {
    %c0_i32 = arith.constant 0 : i32
    %c0_i32_0 = arith.constant 0 : i32
    return %arg0, %arg1, %c0_i32 : i32, i32, i32
  }
  func.func @transform_5(%arg0: i32, %arg1: i32) -> (i32, i32, i32) {
    %c0_i32 = arith.constant 0 : i32
    %c0_i32_0 = arith.constant 0 : i32
    return %arg0, %arg1, %c0_i32 : i32, i32, i32
  }
  func.func @transform_6(%arg0: i32, %arg1: i32) -> (i32, i32, i32) {
    %c0_i32 = arith.constant 0 : i32
    %c0_i32_0 = arith.constant 0 : i32
    return %arg0, %arg1, %c0_i32 : i32, i32, i32
  }
  func.func @transform_7(%arg0: i32, %arg1: i32) -> (i32, i32, i32) {
    %c0_i32 = arith.constant 0 : i32
    %c0_i32_0 = arith.constant 0 : i32
    return %arg0, %arg1, %c0_i32 : i32, i32, i32
  }
}

</mosaic_0001>

<llo_original>
// kernel: _alif_step.1
$region0: #{_alif_step.1}
  #allocation0 [shape = 'u32[]', space=smem, size = 0x4, offset = 0x4, fixed_abs, tag = 'smem constant byte address 0x4 - core index']
  #allocation1 [shape = 'u32[72,128]{1,0:T(1,128)}', space=vmem, size = 0x9000, scoped, tag = 'internal scratch']
  %s0 = inlined_call_operand.vmem [shape: f32[2,8,128], index: 0, kind: input, shape index: {}]
  %s1 = inlined_call_operand.vmem [shape: f32[1,8,128], index: 1, kind: input, shape index: {}]
  %s2 = inlined_call_operand.vmem [shape: f32[1,8,128], index: 2, kind: input, shape index: {}]
  %s3 = inlined_call_operand.vmem [shape: s8[1,8,128], index: 3, kind: input, shape index: {}]
  %s4 = inlined_call_operand.vmem [shape: f32[2,8,128], index: 4, kind: output, shape index: {0}]
  %s5 = inlined_call_operand.vmem [shape: f32[2,8,128], index: 5, kind: output, shape index: {1}]
  %s6 = inlined_call_operand.vmem [shape: f32[2,8,128], index: 6, kind: output, shape index: {2}]
  %s7 = inlined_call_operand.vmem [shape: s8[2,8,128], index: 7, kind: output, shape index: {3}]
  %8 = xla_tuple %s4, %s5, %s6, %s7
  %s9 = sld [smem:[#allocation0]]
  $region73: #{_alif_step.1} parent=0
    _
  %s11 = ssub.s32 1, %s9
  %s12 = scalar_select 0, %s11, %s9
  loop: start=0, step=1, limit=4
  $region2: #{_alif_step.1} parent=0 // loop_pre_header
    _
  $region3: #{_alif_step.1} parent=0 // loop_header
    %s14 = sphi 0, %s18
    %p15 = scmp.ge.s32.totalorder %s14, 4
    %s21 = sphi 0, %s33
    %s22 = sphi 0, %s29
    %s23 = sphi 0, %s21
    %s24 = sphi 0, %s22
    %s25 = sphi 0, %s23
    %s26 = sphi 0, %s24
    %s38 = sphi 0, %s40
    %s41 = sphi 0, %s38
    %s42 = sphi 0, %s41
    %s58 = sphi 0, %s42
    %s64 = sphi 0, %s66
    %s67 = sphi 0, %s64
    %s68 = sphi 0, %s67
    %s84 = sphi 0, %s68
    %s90 = sphi 0, %s92
    %s93 = sphi 0, %s90
    %s94 = sphi 0, %s93
    %s110 = sphi 0, %s94
    %s116 = sphi 0, %s118
    %s119 = sphi 0, %s116
    %s120 = sphi 0, %s119
    %s136 = sphi 0, %s120
    %s144 = sphi 0, %s146
    %s147 = sphi 0, %s144
    %s148 = sphi 0, %s147
    %s164 = sphi 0, %s148
    %s172 = sphi 0, %s174
    %s175 = sphi 0, %s172
    %s176 = sphi 0, %s175
    %s192 = sphi 0, %s176
    %s200 = sphi 0, %s202
    %s203 = sphi 0, %s200
    %s204 = sphi 0, %s203
    %s220 = sphi 0, %s204
    %s228 = sphi 0, %s230
    %s231 = sphi 0, %s228
    %s232 = sphi 0, %s231
    %s248 = sphi 0, %s232
  $region4: #{_alif_step.1} parent=0 // loop_header_branch
    %17 = sbr.rel (%p15) target = $region8
  $region5: #{_alif_step.1} parent=0 // loop_body
    %s19 = ssub.s32 %s14, 1
    %s20 = ssub.s32 %s14, 2
    %s27 = sadd.s32 1, %s22
    %p28 = scmp.ge.s32.totalorder %s27, 1
    %s29 = scalar_select %p28, 0, %s27
    %s30 = sadd.s32 1, %s21
    %s31 = scalar_select %p28, %s30, %s21
    %p32 = scmp.ge.s32.totalorder %s31, 2
    %s33 = scalar_select %p32, 0, %s31
    %s34 = ssub.s32 %s21, %s33
    %s35 = ssub.s32 %s22, %s29
    %s36 = sor.u32 %s34, %s35
    %p37 = scmp.eq.s32.totalorder %s36, 0
    %s39 = sadd.s32 %s38, 1
    %s40 = scalar_select %p37, %s38, %s39
    %p43 = pneg %p37
    %p44 = scmp.eq.s32.totalorder %s14, 1
    %p45 = por %p43, %p44
    %p46 = scmp.ne.s32.totalorder %s38, %s41
    %p47 = scmp.eq.s32.totalorder %s14, 0
    %p48 = por %p46, %p47
    %p49 = scmp.ne.s32.totalorder %s38, %s41
    %p50 = scmp.eq.s32.totalorder %s19, 1
    %p51 = por %p49, %p50
    %p52 = scmp.ne.s32.totalorder %s41, %s42
    %p53 = scmp.eq.s32.totalorder %s19, 0
    %p54 = por %p52, %p53
    %p55 = scmp.ne.s32.totalorder %s41, %s42
    %p56 = scmp.eq.s32.totalorder %s20, 1
    %p57 = por %p55, %p56
    %p59 = scmp.ne.s32.totalorder %s42, %s58
    %p60 = scmp.eq.s32.totalorder %s20, 0
    %p61 = por %p59, %p60
    %s62 = ssub.s32 %s22, %s29
    %p63 = scmp.eq.s32.totalorder %s62, 0
    %s65 = sadd.s32 %s64, 1
    %s66 = scalar_select %p63, %s64, %s65
    %p69 = pneg %p63
    %p70 = scmp.eq.s32.totalorder %s14, 1
    %p71 = por %p69, %p70
    %p72 = scmp.ne.s32.totalorder %s64, %s67
    %p73 = scmp.eq.s32.totalorder %s14, 0
    %p74 = por %p72, %p73
    %p75 = scmp.ne.s32.totalorder %s64, %s67
    %p76 = scmp.eq.s32.totalorder %s19, 1
    %p77 = por %p75, %p76
    %p78 = scmp.ne.s32.totalorder %s67, %s68
    %p79 = scmp.eq.s32.totalorder %s19, 0
    %p80 = por %p78, %p79
    %p81 = scmp.ne.s32.totalorder %s67, %s68
    %p82 = scmp.eq.s32.totalorder %s20, 1
    %p83 = por %p81, %p82
    %p85 = scmp.ne.s32.totalorder %s68, %s84
    %p86 = scmp.eq.s32.totalorder %s20, 0
    %p87 = por %p85, %p86
    %s88 = ssub.s32 %s22, %s29
    %p89 = scmp.eq.s32.totalorder %s88, 0
    %s91 = sadd.s32 %s90, 1
    %s92 = scalar_select %p89, %s90, %s91
    %p95 = pneg %p89
    %p96 = scmp.eq.s32.totalorder %s14, 1
    %p97 = por %p95, %p96
    %p98 = scmp.ne.s32.totalorder %s90, %s93
    %p99 = scmp.eq.s32.totalorder %s14, 0
    %p100 = por %p98, %p99
    %p101 = scmp.ne.s32.totalorder %s90, %s93
    %p102 = scmp.eq.s32.totalorder %s19, 1
    %p103 = por %p101, %p102
    %p104 = scmp.ne.s32.totalorder %s93, %s94
    %p105 = scmp.eq.s32.totalorder %s19, 0
    %p106 = por %p104, %p105
    %p107 = scmp.ne.s32.totalorder %s93, %s94
    %p108 = scmp.eq.s32.totalorder %s20, 1
    %p109 = por %p107, %p108
    %p111 = scmp.ne.s32.totalorder %s94, %s110
    %p112 = scmp.eq.s32.totalorder %s20, 0
    %p113 = por %p111, %p112
    %s114 = ssub.s32 %s22, %s29
    %p115 = scmp.eq.s32.totalorder %s114, 0
    %s117 = sadd.s32 %s116, 1
    %s118 = scalar_select %p115, %s116, %s117
    %p121 = pneg %p115
    %p122 = scmp.eq.s32.totalorder %s14, 1
    %p123 = por %p121, %p122
    %p124 = scmp.ne.s32.totalorder %s116, %s119
    %p125 = scmp.eq.s32.totalorder %s14, 0
    %p126 = por %p124, %p125
    %p127 = scmp.ne.s32.totalorder %s116, %s119
    %p128 = scmp.eq.s32.totalorder %s19, 1
    %p129 = por %p127, %p128
    %p130 = scmp.ne.s32.totalorder %s119, %s120
    %p131 = scmp.eq.s32.totalorder %s19, 0
    %p132 = por %p130, %p131
    %p133 = scmp.ne.s32.totalorder %s119, %s120
    %p134 = scmp.eq.s32.totalorder %s20, 1
    %p135 = por %p133, %p134
    %p137 = scmp.ne.s32.totalorder %s120, %s136
    %p138 = scmp.eq.s32.totalorder %s20, 0
    %p139 = por %p137, %p138
    %s140 = ssub.s32 %s21, %s33
    %s141 = ssub.s32 %s22, %s29
    %s142 = sor.u32 %s140, %s141
    %p143 = scmp.eq.s32.totalorder %s142, 0
    %s145 = sadd.s32 %s144, 1
    %s146 = scalar_select %p143, %s144, %s145
    %p149 = pneg %p143
    %p150 = scmp.eq.s32.totalorder %s14, 1
    %p151 = por %p149, %p150
    %p152 = scmp.ne.s32.totalorder %s144, %s147
    %p153 = scmp.eq.s32.totalorder %s14, 0
    %p154 = por %p152, %p153
    %p155 = scmp.ne.s32.totalorder %s144, %s147
    %p156 = scmp.eq.s32.totalorder %s19, 1
    %p157 = por %p155, %p156
    %p158 = scmp.ne.s32.totalorder %s147, %s148
    %p159 = scmp.eq.s32.totalorder %s19, 0
    %p160 = por %p158, %p159
    %p161 = scmp.ne.s32.totalorder %s147, %s148
    %p162 = scmp.eq.s32.totalorder %s20, 1
    %p163 = por %p161, %p162
    %p165 = scmp.ne.s32.totalorder %s148, %s164
    %p166 = scmp.eq.s32.totalorder %s20, 0
    %p167 = por %p165, %p166
    %s168 = ssub.s32 %s21, %s33
    %s169 = ssub.s32 %s22, %s29
    %s170 = sor.u32 %s168, %s169
    %p171 = scmp.eq.s32.totalorder %s170, 0
    %s173 = sadd.s32 %s172, 1
    %s174 = scalar_select %p171, %s172, %s173
    %p177 = pneg %p171
    %p178 = scmp.eq.s32.totalorder %s14, 1
    %p179 = por %p177, %p178
    %p180 = scmp.ne.s32.totalorder %s172, %s175
    %p181 = scmp.eq.s32.totalorder %s14, 0
    %p182 = por %p180, %p181
    %p183 = scmp.ne.s32.totalorder %s172, %s175
    %p184 = scmp.eq.s32.totalorder %s19, 1
    %p185 = por %p183, %p184
    %p186 = scmp.ne.s32.totalorder %s175, %s176
    %p187 = scmp.eq.s32.totalorder %s19, 0
    %p188 = por %p186, %p187
    %p189 = scmp.ne.s32.totalorder %s175, %s176
    %p190 = scmp.eq.s32.totalorder %s20, 1
    %p191 = por %p189, %p190
    %p193 = scmp.ne.s32.totalorder %s176, %s192
    %p194 = scmp.eq.s32.totalorder %s20, 0
    %p195 = por %p193, %p194
    %s196 = ssub.s32 %s21, %s33
    %s197 = ssub.s32 %s22, %s29
    %s198 = sor.u32 %s196, %s197
    %p199 = scmp.eq.s32.totalorder %s198, 0
    %s201 = sadd.s32 %s200, 1
    %s202 = scalar_select %p199, %s200, %s201
    %p205 = pneg %p199
    %p206 = scmp.eq.s32.totalorder %s14, 1
    %p207 = por %p205, %p206
    %p208 = scmp.ne.s32.totalorder %s200, %s203
    %p209 = scmp.eq.s32.totalorder %s14, 0
    %p210 = por %p208, %p209
    %p211 = scmp.ne.s32.totalorder %s200, %s203
    %p212 = scmp.eq.s32.totalorder %s19, 1
    %p213 = por %p211, %p212
    %p214 = scmp.ne.s32.totalorder %s203, %s204
    %p215 = scmp.eq.s32.totalorder %s19, 0
    %p216 = por %p214, %p215
    %p217 = scmp.ne.s32.totalorder %s203, %s204
    %p218 = scmp.eq.s32.totalorder %s20, 1
    %p219 = por %p217, %p218
    %p221 = scmp.ne.s32.totalorder %s204, %s220
    %p222 = scmp.eq.s32.totalorder %s20, 0
    %p223 = por %p221, %p222
    %s224 = ssub.s32 %s21, %s33
    %s225 = ssub.s32 %s22, %s29
    %s226 = sor.u32 %s224, %s225
    %p227 = scmp.eq.s32.totalorder %s226, 0
    %s229 = sadd.s32 %s228, 1
    %s230 = scalar_select %p227, %s228, %s229
    %p233 = pneg %p227
    %p234 = scmp.eq.s32.totalorder %s14, 1
    %p235 = por %p233, %p234
    %p236 = scmp.ne.s32.totalorder %s228, %s231
    %p237 = scmp.eq.s32.totalorder %s14, 0
    %p238 = por %p236, %p237
    %p239 = scmp.ne.s32.totalorder %s228, %s231
    %p240 = scmp.eq.s32.totalorder %s19, 1
    %p241 = por %p239, %p240
    %p242 = scmp.ne.s32.totalorder %s231, %s232
    %p243 = scmp.eq.s32.totalorder %s19, 0
    %p244 = por %p242, %p243
    %p245 = scmp.ne.s32.totalorder %s231, %s232
    %p246 = scmp.eq.s32.totalorder %s20, 1
    %p247 = por %p245, %p246
    %p249 = scmp.ne.s32.totalorder %s232, %s248
    %p250 = scmp.eq.s32.totalorder %s20, 0
    %p251 = por %p249, %p250
    %p252 = scmp.le.s32.totalorder 1, %s14
    %p253 = scmp.lt.s32.totalorder %s14, 3
    %p254 = pnand %p252, %p253
    %p255 = pneg %p254
    // Predicated region
    $region9: #{_alif_step.1} parent=5 // pred_check
      _
    $region10: #{_alif_step.1} parent=5 // pred_check_branch
      %257 = sbr.rel (%p254) target = $region12
    $region11: #{_alif_step.1} parent=5 // pred_region
      %s258 = ssub.s32 %s14, 1
      // Predicated region
      $region13: #{_alif_step.1} parent=11 // pred_check
        %p259 = pneg %p80
      $region14: #{_alif_step.1} parent=11 // pred_check_branch
        %261 = sbr.rel (%p259) target = $region16
      $region15: #{_alif_step.1} parent=11 // pred_region
        %p262 = scmp.lt.s32.totalorder %s24, 0
        %s263 = scalar_select %p262, %s24, 0
        %s264 = smul.addr %s263, 8
        %s265 = scalar_lea.vmem %s1, %s264
      $region16: #{_alif_step.1} parent=11 // pred_fallthru
        _
      // Predicated region
      $region17: #{_alif_step.1} parent=11 // pred_check
        %p266 = pneg %p106
      $region18: #{_alif_step.1} parent=11 // pred_check_branch
        %268 = sbr.rel (%p266) target = $region20
      $region19: #{_alif_step.1} parent=11 // pred_region
        %p269 = scmp.lt.s32.totalorder %s24, 0
        %s270 = scalar_select %p269, %s24, 0
        %s271 = smul.addr %s270, 8
        %s272 = scalar_lea.vmem %s2, %s271
      $region20: #{_alif_step.1} parent=11 // pred_fallthru
        _
      // Predicated region
      $region21: #{_alif_step.1} parent=11 // pred_check
        %p273 = pneg %p132
      $region22: #{_alif_step.1} parent=11 // pred_check_branch
        %275 = sbr.rel (%p273) target = $region24
      $region23: #{_alif_step.1} parent=11 // pred_region
        %p276 = scmp.lt.s32.totalorder %s24, 0
        %s277 = scalar_select %p276, %s24, 0
        %s278 = smul.addr %s277, 2
        %s279 = scalar_lea.vmem %s3, %s278
      $region24: #{_alif_step.1} parent=11 // pred_fallthru
        _
    $region12: #{_alif_step.1} parent=5 // pred_fallthru
      _
    %p280 = scmp.lt.s32.totalorder %s14, 2
    // Predicated region
    $region25: #{_alif_step.1} parent=5 // pred_check
      %p281 = pneg %p280
    $region26: #{_alif_step.1} parent=5 // pred_check_branch
      %283 = sbr.rel (%p281) target = $region28
    $region27: #{_alif_step.1} parent=5 // pred_region
      // Predicated region
      $region29: #{_alif_step.1} parent=27 // pred_check
        %p284 = pneg %p48
      $region30: #{_alif_step.1} parent=27 // pred_check_branch
        %286 = sbr.rel (%p284) target = $region32
      $region31: #{_alif_step.1} parent=27 // pred_region
        %p287 = scmp.lt.s32.totalorder %s21, 1
        %s288 = scalar_select %p287, %s21, 1
        %p289 = scmp.lt.s32.totalorder %s22, 0
        %s290 = scalar_select %p289, %s22, 0
        %s291 = sadd.s32 %s290, %s288
        %s292 = smul.addr %s291, 8
        %s293 = scalar_lea.vmem %s0, %s292
      $region32: #{_alif_step.1} parent=27 // pred_fallthru
        _
    $region28: #{_alif_step.1} parent=5 // pred_fallthru
      _
    %p294 = scmp.le.s32.totalorder 1, %s14
    %p295 = scmp.lt.s32.totalorder %s14, 3
    %p296 = pnand %p294, %p295
    %p297 = pneg %p296
    // Predicated region
    $region33: #{_alif_step.1} parent=5 // pred_check
      _
    $region34: #{_alif_step.1} parent=5 // pred_check_branch
      %299 = sbr.rel (%p296) target = $region36
    $region35: #{_alif_step.1} parent=5 // pred_region
      %s300 = ssub.s32 %s14, 1
      %p301 = scmp.lt.s32.totalorder %s23, 1
      %s302 = scalar_select %p301, %s23, 1
      %p303 = scmp.lt.s32.totalorder %s24, 0
      %s304 = scalar_select %p303, %s24, 0
      %s305 = sadd.s32 %s304, %s302
      %s306 = smul.addr %s305, 8
      %s307 = scalar_lea.vmem %s0, %s306
      %p308 = pneg %p54
      %p309 = pneg %p51
      %p310 = scmp.lt.s32.totalorder %s24, 0
      %s311 = scalar_select %p310, %s24, 0
      %s312 = smul.addr %s311, 8
      %s313 = scalar_lea.vmem %s1, %s312
      %p314 = pneg %p80
      %p315 = pneg %p77
      %p316 = scmp.lt.s32.totalorder %s24, 0
      %s317 = scalar_select %p316, %s24, 0
      %s318 = smul.addr %s317, 8
      %s319 = scalar_lea.vmem %s2, %s318
      %p320 = pneg %p106
      %p321 = pneg %p103
      %p322 = scmp.lt.s32.totalorder %s24, 0
      %s323 = scalar_select %p322, %s24, 0
      %s324 = smul.addr %s323, 2
      %s325 = scalar_lea.vmem %s3, %s324
      %p326 = pneg %p132
      %p327 = pneg %p129
      %p328 = pneg %p160
      %p329 = pneg %p157
      %p330 = scmp.lt.s32.totalorder %s23, 1
      %s331 = scalar_select %p330, %s23, 1
      %p332 = scmp.lt.s32.totalorder %s24, 0
      %s333 = scalar_select %p332, %s24, 0
      %s334 = sadd.s32 %s333, %s331
      %s335 = smul.addr %s334, 8
      %s336 = scalar_lea.vmem %s4, %s335
      %p337 = pneg %p188
      %p338 = pneg %p185
      %p339 = scmp.lt.s32.totalorder %s23, 1
      %s340 = scalar_select %p339, %s23, 1
      %p341 = scmp.lt.s32.totalorder %s24, 0
      %s342 = scalar_select %p341, %s24, 0
      %s343 = sadd.s32 %s342, %s340
      %s344 = smul.addr %s343, 8
      %s345 = scalar_lea.vmem %s5, %s344
      %p346 = pneg %p216
      %p347 = pneg %p213
      %p348 = scmp.lt.s32.totalorder %s23, 1
      %s349 = scalar_select %p348, %s23, 1
      %p350 = scmp.lt.s32.totalorder %s24, 0
      %s351 = scalar_select %p350, %s24, 0
      %s352 = sadd.s32 %s351, %s349
      %s353 = smul.addr %s352, 8
      %s354 = scalar_lea.vmem %s6, %s353
      %p355 = pneg %p244
      %p356 = pneg %p241
      %p357 = scmp.lt.s32.totalorder %s23, 1
      %s358 = scalar_select %p357, %s23, 1
      %p359 = scmp.lt.s32.totalorder %s24, 0
      %s360 = scalar_select %p359, %s24, 0
      %s361 = sadd.s32 %s360, %s358
      %s362 = smul.addr %s361, 2
      %s363 = scalar_lea.vmem %s7, %s362
      %p364 = scmp.lt.s32.totalorder %s23, 1
      %s365 = scalar_select %p364, %s23, 1
      %p366 = scmp.lt.s32.totalorder %s24, 0
      %s367 = scalar_select %p366, %s24, 0
      %s368 = sadd.s32 %s367, %s365
      %s369 = smul.addr %s368, 8
      %s370 = scalar_lea.vmem %s0, %s369
      %p371 = scmp.lt.s32.totalorder %s24, 0
      %s372 = scalar_select %p371, %s24, 0
      %s373 = smul.addr %s372, 8
      %s374 = scalar_lea.vmem %s1, %s373
      %p375 = scmp.lt.s32.totalorder %s24, 0
      %s376 = scalar_select %p375, %s24, 0
      %s377 = smul.addr %s376, 8
      %s378 = scalar_lea.vmem %s2, %s377
      %p379 = scmp.lt.s32.totalorder %s24, 0
      %s380 = scalar_select %p379, %s24, 0
      %s381 = smul.addr %s380, 2
      %s382 = scalar_lea.vmem %s3, %s381
      %p383 = scmp.lt.s32.totalorder %s23, 1
      %s384 = scalar_select %p383, %s23, 1
      %p385 = scmp.lt.s32.totalorder %s24, 0
      %s386 = scalar_select %p385, %s24, 0
      %s387 = sadd.s32 %s386, %s384
      %s388 = smul.addr %s387, 8
      %s389 = scalar_lea.vmem %s4, %s388
      %p390 = scmp.lt.s32.totalorder %s23, 1
      %s391 = scalar_select %p390, %s23, 1
      %p392 = scmp.lt.s32.totalorder %s24, 0
      %s393 = scalar_select %p392, %s24, 0
      %s394 = sadd.s32 %s393, %s391
      %s395 = smul.addr %s394, 8
      %s396 = scalar_lea.vmem %s5, %s395
      %p397 = scmp.lt.s32.totalorder %s23, 1
      %s398 = scalar_select %p397, %s23, 1
      %p399 = scmp.lt.s32.totalorder %s24, 0
      %s400 = scalar_select %p399, %s24, 0
      %s401 = sadd.s32 %s400, %s398
      %s402 = smul.addr %s401, 8
      %s403 = scalar_lea.vmem %s6, %s402
      %p404 = scmp.lt.s32.totalorder %s23, 1
      %s405 = scalar_select %p404, %s23, 1
      %p406 = scmp.lt.s32.totalorder %s24, 0
      %s407 = scalar_select %p406, %s24, 0
      %s408 = sadd.s32 %s407, %s405
      %s409 = smul.addr %s408, 2
      %s410 = scalar_lea.vmem %s7, %s409
      %v411 = vld [vmem:[%s382] sm:$0x3]
      %v412 = vunpack.c.0.s8 %v411
      %v413 = vsub.s32 %v412, 1
      %vm414 = vcmp.gt.s32.totalorder %v413, 0
      %v415 = vsel %vm414, %v413, 0
      %vm416 = vcmp.eq.s32.totalorder %v415, 0
      %v417 = vsel %vm416, 1, 0
      %v418 = vcvt.s32.f32 %v417
      %v419 = vld [vmem:[%s374] sm:$0xff]
      %v420 = vmul.f32 %v419, 0.95122945
      %v421 = vld [vmem:[%s370] sm:$0xff]
      %v422 = vadd.f32 %v420, %v421
      %v423 = vld [vmem:[%s378] sm:$0xff]
      %v424 = vsub.f32 %v422, %v423
      %v425 = vmul.f32 %v424, %v418
      %vm426 = vcmp.ge.f32.partialorder %v425, 1.0
      %v427 = vsel %vm426, 1, 0
      %v428 = vcvt.s32.f32 %v427
      %v429 = vsel %vm426, 0.0, %v425
      %v430 = vmul.f32 %v423, 0.99501246
      %v431 = vmul.f32 %v428, 0.1
      %v432 = vadd.f32 %v430, %v431
      %v433 = vsel %vm426, 2, %v415
      %434 = vst [vmem:[%s389] sm:$0xff] %v428
      %435 = vst [vmem:[%s396] sm:$0xff] %v429
      %436 = vst [vmem:[%s403] sm:$0xff] %v432
      %v437 = vpack.c.b16 %v433, %v433
      %v438 = vpack.c.b8 %v437, %v437
      %439 = vst [vmem:[%s410] sm:$0x3] %v438
      %p440 = scmp.lt.s32.totalorder %s23, 1
      %s441 = scalar_select %p440, %s23, 1
      %p442 = scmp.lt.s32.totalorder %s24, 0
      %s443 = scalar_select %p442, %s24, 0
      %s444 = sadd.s32 %s443, %s441
      %s445 = smul.addr %s444, 8
      %s446 = scalar_lea.vmem %s4, %s445
      %p447 = scmp.lt.s32.totalorder %s23, 1
      %s448 = scalar_select %p447, %s23, 1
      %p449 = scmp.lt.s32.totalorder %s24, 0
      %s450 = scalar_select %p449, %s24, 0
      %s451 = sadd.s32 %s450, %s448
      %s452 = smul.addr %s451, 8
      %s453 = scalar_lea.vmem %s5, %s452
      %p454 = scmp.lt.s32.totalorder %s23, 1
      %s455 = scalar_select %p454, %s23, 1
      %p456 = scmp.lt.s32.totalorder %s24, 0
      %s457 = scalar_select %p456, %s24, 0
      %s458 = sadd.s32 %s457, %s455
      %s459 = smul.addr %s458, 8
      %s460 = scalar_lea.vmem %s6, %s459
      %p461 = scmp.lt.s32.totalorder %s23, 1
      %s462 = scalar_select %p461, %s23, 1
      %p463 = scmp.lt.s32.totalorder %s24, 0
      %s464 = scalar_select %p463, %s24, 0
      %s465 = sadd.s32 %s464, %s462
      %s466 = smul.addr %s465, 2
      %s467 = scalar_lea.vmem %s7, %s466
      // Predicated region
      $region37: #{_alif_step.1} parent=35 // pred_check
        %p468 = pneg %p157
      $region38: #{_alif_step.1} parent=35 // pred_check_branch
        %470 = sbr.rel (%p468) target = $region40
      $region39: #{_alif_step.1} parent=35 // pred_region
        _
      $region40: #{_alif_step.1} parent=35 // pred_fallthru
        _
      // Predicated region
      $region41: #{_alif_step.1} parent=35 // pred_check
        %p471 = pneg %p185
      $region42: #{_alif_step.1} parent=35 // pred_check_branch
        %473 = sbr.rel (%p471) target = $region44
      $region43: #{_alif_step.1} parent=35 // pred_region
        _
      $region44: #{_alif_step.1} parent=35 // pred_fallthru
        _
      // Predicated region
      $region45: #{_alif_step.1} parent=35 // pred_check
        %p474 = pneg %p213
      $region46: #{_alif_step.1} parent=35 // pred_check_branch
        %476 = sbr.rel (%p474) target = $region48
      $region47: #{_alif_step.1} parent=35 // pred_region
        _
      $region48: #{_alif_step.1} parent=35 // pred_fallthru
        _
      // Predicated region
      $region49: #{_alif_step.1} parent=35 // pred_check
        %p477 = pneg %p241
      $region50: #{_alif_step.1} parent=35 // pred_check_branch
        %479 = sbr.rel (%p477) target = $region52
      $region51: #{_alif_step.1} parent=35 // pred_region
        _
      $region52: #{_alif_step.1} parent=35 // pred_fallthru
        _
    $region36: #{_alif_step.1} parent=5 // pred_fallthru
      _
    %p480 = scmp.le.s32.totalorder 2, %s14
    // Predicated region
    $region53: #{_alif_step.1} parent=5 // pred_check
      %p481 = pneg %p480
    $region54: #{_alif_step.1} parent=5 // pred_check_branch
      %483 = sbr.rel (%p481) target = $region56
    $region55: #{_alif_step.1} parent=5 // pred_region
      %s484 = ssub.s32 %s14, 2
      // Predicated region
      $region57: #{_alif_step.1} parent=55 // pred_check
        %p485 = pneg %p163
      $region58: #{_alif_step.1} parent=55 // pred_check_branch
        %487 = sbr.rel (%p485) target = $region60
      $region59: #{_alif_step.1} parent=55 // pred_region
        %p488 = scmp.lt.s32.totalorder %s25, 1
        %s489 = scalar_select %p488, %s25, 1
        %p490 = scmp.lt.s32.totalorder %s26, 0
        %s491 = scalar_select %p490, %s26, 0
        %s492 = sadd.s32 %s491, %s489
        %s493 = smul.addr %s492, 8
        %s494 = scalar_lea.vmem %s4, %s493
      $region60: #{_alif_step.1} parent=55 // pred_fallthru
        _
      // Predicated region
      $region61: #{_alif_step.1} parent=55 // pred_check
        %p495 = pneg %p191
      $region62: #{_alif_step.1} parent=55 // pred_check_branch
        %497 = sbr.rel (%p495) target = $region64
      $region63: #{_alif_step.1} parent=55 // pred_region
        %p498 = scmp.lt.s32.totalorder %s25, 1
        %s499 = scalar_select %p498, %s25, 1
        %p500 = scmp.lt.s32.totalorder %s26, 0
        %s501 = scalar_select %p500, %s26, 0
        %s502 = sadd.s32 %s501, %s499
        %s503 = smul.addr %s502, 8
        %s504 = scalar_lea.vmem %s5, %s503
      $region64: #{_alif_step.1} parent=55 // pred_fallthru
        _
      // Predicated region
      $region65: #{_alif_step.1} parent=55 // pred_check
        %p505 = pneg %p219
      $region66: #{_alif_step.1} parent=55 // pred_check_branch
        %507 = sbr.rel (%p505) target = $region68
      $region67: #{_alif_step.1} parent=55 // pred_region
        %p508 = scmp.lt.s32.totalorder %s25, 1
        %s509 = scalar_select %p508, %s25, 1
        %p510 = scmp.lt.s32.totalorder %s26, 0
        %s511 = scalar_select %p510, %s26, 0
        %s512 = sadd.s32 %s511, %s509
        %s513 = smul.addr %s512, 8
        %s514 = scalar_lea.vmem %s6, %s513
      $region68: #{_alif_step.1} parent=55 // pred_fallthru
        _
      // Predicated region
      $region69: #{_alif_step.1} parent=55 // pred_check
        %p515 = pneg %p247
      $region70: #{_alif_step.1} parent=55 // pred_check_branch
        %517 = sbr.rel (%p515) target = $region72
      $region71: #{_alif_step.1} parent=55 // pred_region
        %p518 = scmp.lt.s32.totalorder %s25, 1
        %s519 = scalar_select %p518, %s25, 1
        %p520 = scmp.lt.s32.totalorder %s26, 0
        %s521 = scalar_select %p520, %s26, 0
        %s522 = sadd.s32 %s521, %s519
        %s523 = smul.addr %s522, 2
        %s524 = scalar_lea.vmem %s7, %s523
      $region72: #{_alif_step.1} parent=55 // pred_fallthru
        _
    $region56: #{_alif_step.1} parent=5 // pred_fallthru
      _
  $region6: #{_alif_step.1} parent=0 // loop_footer
    %s18 = sadd.s32 1, %s14
  $region7: #{_alif_step.1} parent=0 // loop_footer_branch
    %13 = sbr.rel target = $region3
  $region8: #{_alif_step.1} parent=0 // loop_exit
    _

</llo_original>
